<compile_context>
chip_gen: v6e
topology: v6e:2x2x1
jax: 0.10.0
libtpu: 0.0.40
codegen_flags: <defaults>
</compile_context>

<pallas_src>
import functools
import math

import jax
import jax.numpy as jnp
from jax.experimental import pallas as pl
from jax.experimental.pallas import tpu as pltpu

D_MODEL = 512        # fixed by nn.TransformerDecoderLayer(d_model=512, ...)
D_FF = 2048          # torch default dim_feedforward
LN_EPS = 1e-5


# ---------------------------------------------------------------------------
# Encoder stand-in: tubelet patch embedding kernel (batch element 0 only)
# ---------------------------------------------------------------------------
def _embed_kernel(p_ref, w_ref, b_ref, pos_ref, o_ref):
    emb = jnp.dot(p_ref[...], w_ref[...], preferred_element_type=jnp.float32)
    o_ref[...] = emb + b_ref[...] + pos_ref[...]


def encoder_embed(patches, w, b, pos):
    N, P = patches.shape
    D = w.shape[1]
    return pl.pallas_call(
        _embed_kernel,
        out_shape=jax.ShapeDtypeStruct((N, D), jnp.float32),
        grid=(1,),
        in_specs=[
            pl.BlockSpec((N, P), lambda i: (0, 0)),
            pl.BlockSpec((P, D), lambda i: (0, 0)),
            pl.BlockSpec((1, D), lambda i: (0, 0)),
            pl.BlockSpec((N, D), lambda i: (0, 0)),
        ],
        out_specs=pl.BlockSpec((N, D), lambda i: (0, 0)),
        compiler_params=pltpu.CompilerParams(
            dimension_semantics=("arbitrary",)),
    )(patches, w, b, pos)


# ---------------------------------------------------------------------------
# Fused decoder kernel: one grid step == one TransformerDecoderLayer
# ---------------------------------------------------------------------------
def _layernorm(y, w, b, eps=LN_EPS):
    mu = jnp.mean(y, axis=-1, keepdims=True)
    yc = y - mu
    var = jnp.mean(yc * yc, axis=-1, keepdims=True)
    return yc * jax.lax.rsqrt(var + eps) * w + b


def _mha(ctx_ref, q, k, v, mask, nhead, head_dim, scale):
    """Per-head attention; head outputs written into ctx_ref, returns (L, E)."""
    for h in range(nhead):
        sl = slice(h * head_dim, (h + 1) * head_dim)
        qh, kh, vh = q[:, sl], k[:, sl], v[:, sl]
        s = jax.lax.dot_general(qh, kh, (((1,), (1,)), ((), ())),
                                preferred_element_type=jnp.float32) * scale
        if mask is not None:
            s = s + mask
        s = s - jnp.max(s, axis=-1, keepdims=True)
        p = jnp.exp(s)
        p = p * pl.reciprocal(jnp.sum(p, axis=-1, keepdims=True), approx=True)
        ctx_ref[:, sl] = jnp.dot(p, vh, preferred_element_type=jnp.float32)
    return ctx_ref[...]


def _decoder_layer_kernel(nhead,
                          tgt_ref, mem_ref, mask_ref,
                          saw_ref, sab_ref, saow_ref, saob_ref,
                          n1w_ref, n1b_ref,
                          caqw_ref, caqb_ref, cakvw_ref, cakvb_ref,
                          caow_ref, caob_ref, n2w_ref, n2b_ref,
                          w1_ref, b1_ref, w2_ref, b2_ref, n3w_ref, n3b_ref,
                          out_ref, ctx_ref):
    E = out_ref.shape[-1]
    D = E // nhead
    scale = 1.0 / math.sqrt(D)

    # first layer consumes the generated tgt; afterwards the decoder state
    # stays resident in out_ref (same output block for every layer index)
    @pl.when(pl.program_id(0) == 0)
    def _():
        out_ref[...] = tgt_ref[...]

    x = out_ref[...]                              # (L, E) f32, carried state
    xb = x.astype(jnp.bfloat16)

    # ---- masked self-attention + add & norm ----
    qkv = jnp.dot(xb, saw_ref[0], preferred_element_type=jnp.float32) + sab_ref[0]
    ctx = _mha(ctx_ref, qkv[:, :E], qkv[:, E:2 * E], qkv[:, 2 * E:],
               mask_ref[...], nhead, D, scale)
    attn = jnp.dot(ctx.astype(jnp.bfloat16), saow_ref[0],
                   preferred_element_type=jnp.float32) + saob_ref[0]
    y = _layernorm(x + attn, n1w_ref[0], n1b_ref[0])

    # ---- cross-attention over memory + add & norm (no mask) ----
    q = jnp.dot(y.astype(jnp.bfloat16), caqw_ref[0],
                preferred_element_type=jnp.float32) + caqb_ref[0]
    kv = jnp.dot(mem_ref[...], cakvw_ref[0],
                 preferred_element_type=jnp.float32) + cakvb_ref[0]
    ctx = _mha(ctx_ref, q, kv[:, :E], kv[:, E:], None, nhead, D, scale)
    attn = jnp.dot(ctx.astype(jnp.bfloat16), caow_ref[0],
                   preferred_element_type=jnp.float32) + caob_ref[0]
    z = _layernorm(y + attn, n2w_ref[0], n2b_ref[0])

    # ---- feed-forward (linear / relu / linear) + add & norm ----
    h = jnp.dot(z.astype(jnp.bfloat16), w1_ref[0],
                preferred_element_type=jnp.float32) + b1_ref[0]
    h = jnp.maximum(h, 0.0)
    f = jnp.dot(h.astype(jnp.bfloat16), w2_ref[0],
                preferred_element_type=jnp.float32) + b2_ref[0]
    out_ref[...] = _layernorm(z + f, n3w_ref[0], n3b_ref[0])


def decoder_forward(tgt, memory, mask, dec, nhead):
    L, E = tgt.shape
    S = memory.shape[0]
    depth = dec["sa_w"].shape[0]
    F = dec["w1"].shape[-1]

    def cmap(l):        # constant blocks (DMA'd once, resident across layers)
        return (0, 0)

    def wmap(l):        # per-layer stacked weights (pipelined across layers)
        return (l, 0, 0)

    in_specs = [
        pl.BlockSpec((L, E), cmap),             # tgt
        pl.BlockSpec((S, E), cmap),             # memory (bf16)
        pl.BlockSpec((L, L), cmap),             # lookahead mask
        pl.BlockSpec((1, E, 3 * E), wmap),      # sa_w  (fused qkv)
        pl.BlockSpec((1, 1, 3 * E), wmap),      # sa_b
        pl.BlockSpec((1, E, E), wmap),          # sa_ow
        pl.BlockSpec((1, 1, E), wmap),          # sa_ob
        pl.BlockSpec((1, 1, E), wmap),          # n1w
        pl.BlockSpec((1, 1, E), wmap),          # n1b
        pl.BlockSpec((1, E, E), wmap),          # ca_qw
        pl.BlockSpec((1, 1, E), wmap),          # ca_qb
        pl.BlockSpec((1, E, 2 * E), wmap),      # ca_kvw (fused kv)
        pl.BlockSpec((1, 1, 2 * E), wmap),      # ca_kvb
        pl.BlockSpec((1, E, E), wmap),          # ca_ow
        pl.BlockSpec((1, 1, E), wmap),          # ca_ob
        pl.BlockSpec((1, 1, E), wmap),          # n2w
        pl.BlockSpec((1, 1, E), wmap),          # n2b
        pl.BlockSpec((1, E, F), wmap),          # w1
        pl.BlockSpec((1, 1, F), wmap),          # b1
        pl.BlockSpec((1, F, E), wmap),          # w2
        pl.BlockSpec((1, 1, E), wmap),          # b2
        pl.BlockSpec((1, 1, E), wmap),          # n3w
        pl.BlockSpec((1, 1, E), wmap),          # n3b
    ]
    return pl.pallas_call(
        functools.partial(_decoder_layer_kernel, nhead),
        out_shape=jax.ShapeDtypeStruct((L, E), jnp.float32),
        grid=(depth,),
        in_specs=in_specs,
        out_specs=pl.BlockSpec((L, E), lambda l: (0, 0)),
        scratch_shapes=[pltpu.VMEM((L, E), jnp.float32)],
        compiler_params=pltpu.CompilerParams(
            dimension_semantics=("arbitrary",),     # carried state across layers
            vmem_limit_bytes=40 * 1024 * 1024),     # ~2x 8MB bf16 layer weights
    )(tgt, memory, mask,
      dec["sa_w"], dec["sa_b"], dec["sa_ow"], dec["sa_ob"],
      dec["n1w"], dec["n1b"],
      dec["ca_qw"], dec["ca_qb"], dec["ca_kvw"], dec["ca_kvb"],
      dec["ca_ow"], dec["ca_ob"], dec["n2w"], dec["n2b"],
      dec["w1"], dec["b1"], dec["w2"], dec["b2"], dec["n3w"], dec["n3b"])


# ---------------------------------------------------------------------------
# Parameters (deterministic, synthetic init; weights bf16, biases/LN f32)
# ---------------------------------------------------------------------------
def init_params(key, patch_dim_pad, num_tokens, dec_depth):
    keys = jax.random.split(key, 9)
    E, F = D_MODEL, D_FF

    def bf16(k, shape, scale=0.02):
        return (scale * jax.random.normal(k, shape, dtype=jnp.float32)
                ).astype(jnp.bfloat16)

    def zeros(*s):
        return jnp.zeros(s, jnp.float32)

    def ones(*s):
        return jnp.ones(s, jnp.float32)

    return {
        "embed_w": bf16(keys[0], (patch_dim_pad, E)),
        "embed_b": zeros(1, E),
        "pos": (0.02 * jax.random.normal(keys[1], (num_tokens, E))
                ).astype(jnp.float32),
        "decoder": {
            "sa_w": bf16(keys[2], (dec_depth, E, 3 * E)),
            "sa_b": zeros(dec_depth, 1, 3 * E),
            "sa_ow": bf16(keys[3], (dec_depth, E, E)),
            "sa_ob": zeros(dec_depth, 1, E),
            "n1w": ones(dec_depth, 1, E),
            "n1b": zeros(dec_depth, 1, E),
            "ca_qw": bf16(keys[4], (dec_depth, E, E)),
            "ca_qb": zeros(dec_depth, 1, E),
            "ca_kvw": bf16(keys[5], (dec_depth, E, 2 * E)),
            "ca_kvb": zeros(dec_depth, 1, 2 * E),
            "ca_ow": bf16(keys[6], (dec_depth, E, E)),
            "ca_ob": zeros(dec_depth, 1, E),
            "n2w": ones(dec_depth, 1, E),
            "n2b": zeros(dec_depth, 1, E),
            "w1": bf16(keys[7], (dec_depth, E, F)),
            "b1": zeros(dec_depth, 1, F),
            "w2": bf16(keys[8], (dec_depth, F, E)),
            "b2": zeros(dec_depth, 1, E),
            "n3w": ones(dec_depth, 1, E),
            "n3b": zeros(dec_depth, 1, E),
        },
    }


# ---------------------------------------------------------------------------
# Full forward (mirrors ViVIT_CaptionerModel3.forward)
# ---------------------------------------------------------------------------
def vivit_captioner_forward(x, params, patch_t, patch_size, nhead):
    # layout: x is (B, C, T, H, W)
    B, C, T, H, W = x.shape
    assert D_MODEL % nhead == 0
    pt, ps = patch_t, patch_size
    nt, nh, nw = T // pt, H // ps, W // ps

    # Only image_embedding[0] feeds the decoder -> embed batch element 0 only.
    patches = x[:1].reshape(1, C, nt, pt, nh, ps, nw, ps)
    patches = patches.transpose(0, 2, 4, 6, 1, 3, 5, 7)
    patches = patches.reshape(nt * nh * nw, C * pt * ps * ps)
    # zero-pad the contraction dim to a full 128-lane tile
    p_pad = params["embed_w"].shape[0]
    patches = jnp.pad(patches, ((0, 0), (0, p_pad - patches.shape[1])))
    patches = patches.astype(jnp.bfloat16)

    memory = encoder_embed(patches, params["embed_w"],
                           params["embed_b"], params["pos"])
    rows, columns = memory.shape

    # generate_tgt(rows, columns, start_index=12)
    tgt = jnp.zeros((rows, columns), jnp.float32).at[12, 0].set(1.0)

    # create_lookahead_mask(rows): -inf strictly above the diagonal
    idx = jnp.arange(rows)
    tgt_mask = jnp.where(idx[None, :] > idx[:, None],
                         jnp.float32(-jnp.inf), jnp.float32(0.0))

    return decoder_forward(tgt, memory.astype(jnp.bfloat16), tgt_mask,
                           params["decoder"], nhead)


if __name__ == "__main__":
    # Small shapes consistent with the module:
    #   frames=4, frame_size=16, patch_t=2, patch_size=4, channels=3,
    #   dec_depth=2, dec_heads=8, d_model=512 (fixed by the decoder layer).
    B, C, T, H, W = 2, 3, 4, 16, 16
    patch_t, patch_size = 2, 4
    dec_depth, dec_heads = 2, 8
    num_tokens = (T // patch_t) * (H // patch_size) * (W // patch_size)  # 32
    patch_dim = C * patch_t * patch_size * patch_size                    # 96
    patch_dim_pad = ((patch_dim + 127) // 128) * 128                     # 128

    key = jax.random.PRNGKey(0)
    kx, kp = jax.random.split(key)
    x = jax.random.normal(kx, (B, C, T, H, W), dtype=jnp.float32)
    params = init_params(kp, patch_dim_pad, num_tokens, dec_depth)

    out = vivit_captioner_forward(x, params, patch_t, patch_size, dec_heads)
    out = jax.block_until_ready(out)

    assert out.shape == (num_tokens, D_MODEL), out.shape
    assert bool(jnp.all(jnp.isfinite(out)))
    print("KERNEL_OK")
</pallas_src>

<mosaic_0001>
module attributes {stable_mosaic.version = 11 : i64} {
  func.func @_embed_kernel(%arg0: i32, %arg1: memref<32x128xbf16, #tpu.memory_space<vmem>>, %arg2: memref<128x512xbf16, #tpu.memory_space<vmem>>, %arg3: memref<1x512xf32, #tpu.memory_space<vmem>>, %arg4: memref<32x512xf32, #tpu.memory_space<vmem>>, %arg5: memref<32x512xf32, #tpu.memory_space<vmem>>) attributes {dimension_semantics = [#tpu.dimension_semantics<arbitrary>], iteration_bounds = array<i64: 1>, scalar_prefetch = 0 : i64, scratch_operands = 0 : i64, tpu.core_type = #tpu.core_type<tc>, window_params = [{pipeline_mode = #tpu.pipeline_mode<synchronous>, transform_indices = @transform_0, window_bounds = array<i64: 32, 128>}, {pipeline_mode = #tpu.pipeline_mode<synchronous>, transform_indices = @transform_1, window_bounds = array<i64: 128, 512>}, {pipeline_mode = #tpu.pipeline_mode<synchronous>, transform_indices = @transform_2, window_bounds = array<i64: 1, 512>}, {pipeline_mode = #tpu.pipeline_mode<synchronous>, transform_indices = @transform_3, window_bounds = array<i64: 32, 512>}, {pipeline_mode = #tpu.pipeline_mode<synchronous>, transform_indices = @transform_4, window_bounds = array<i64: 32, 512>}]} {
    %c0 = arith.constant 0 : index
    %c0_0 = arith.constant 0 : index
    %0 = vector.load %arg1[%c0, %c0_0] : memref<32x128xbf16, #tpu.memory_space<vmem>>, vector<32x128xbf16>
    %c0_1 = arith.constant 0 : index
    %c0_2 = arith.constant 0 : index
    %1 = vector.load %arg2[%c0_1, %c0_2] : memref<128x512xbf16, #tpu.memory_space<vmem>>, vector<128x512xbf16>
    %cst = arith.constant dense<0.000000e+00> : vector<32x512xf32>
    %2 = tpu.matmul %0, %1, %cst {dimension_numbers = #tpu.dot_dimension_numbers<[1], [0], [0], [1], [0, 0, 1, 1], [], []>} : vector<32x128xbf16>, vector<128x512xbf16>, vector<32x512xf32> -> vector<32x512xf32>
    %c0_3 = arith.constant 0 : index
    %c0_4 = arith.constant 0 : index
    %3 = vector.load %arg3[%c0_3, %c0_4] : memref<1x512xf32, #tpu.memory_space<vmem>>, vector<1x512xf32>
    %4 = vector.broadcast %3 : vector<1x512xf32> to vector<32x512xf32>
    %5 = arith.addf %2, %4 : vector<32x512xf32>
    %c0_5 = arith.constant 0 : index
    %c0_6 = arith.constant 0 : index
    %6 = vector.load %arg4[%c0_5, %c0_6] : memref<32x512xf32, #tpu.memory_space<vmem>>, vector<32x512xf32>
    %7 = arith.addf %5, %6 : vector<32x512xf32>
    %c0_7 = arith.constant 0 : index
    %c0_8 = arith.constant 0 : index
    %8 = vector.load %arg5[%c0_7, %c0_8] : memref<32x512xf32, #tpu.memory_space<vmem>>, vector<32x512xf32>
    tpu.vector_store %arg5[%c0_7, %c0_8], %7 {strides = array<i32>} : memref<32x512xf32, #tpu.memory_space<vmem>>, vector<32x512xf32>,
    return
  }
  func.func @transform_0(%arg0: i32) -> (i32, i32) {
    %c0_i32 = arith.constant 0 : i32
    %c0_i32_0 = arith.constant 0 : i32
    %c0_i32_1 = arith.constant 0 : i32
    return %c0_i32, %c0_i32_0 : i32, i32
  }
  func.func @transform_1(%arg0: i32) -> (i32, i32) {
    %c0_i32 = arith.constant 0 : i32
    %c0_i32_0 = arith.constant 0 : i32
    %c0_i32_1 = arith.constant 0 : i32
    return %c0_i32, %c0_i32_0 : i32, i32
  }
  func.func @transform_2(%arg0: i32) -> (i32, i32) {
    %c0_i32 = arith.constant 0 : i32
    %c0_i32_0 = arith.constant 0 : i32
    %c0_i32_1 = arith.constant 0 : i32
    return %c0_i32, %c0_i32_0 : i32, i32
  }
  func.func @transform_3(%arg0: i32) -> (i32, i32) {
    %c0_i32 = arith.constant 0 : i32
    %c0_i32_0 = arith.constant 0 : i32
    %c0_i32_1 = arith.constant 0 : i32
    return %c0_i32, %c0_i32_0 : i32, i32
  }
  func.func @transform_4(%arg0: i32) -> (i32, i32) {
    %c0_i32 = arith.constant 0 : i32
    %c0_i32_0 = arith.constant 0 : i32
    %c0_i32_1 = arith.constant 0 : i32
    return %c0_i32, %c0_i32_0 : i32, i32
  }
}

</mosaic_0001>

<llo_original>
// kernel: tpu_custom_call.1
$region0: #{tpu_custom_call.1}
  #allocation0 [shape = 'u32[]', space=smem, size = 0x4, offset = 0x4, fixed_abs, tag = 'smem constant byte address 0x4 - core index']
  #allocation1 [shape = 'u32[144,128]{1,0:T(1,128)}', space=vmem, size = 0x12000, scoped, tag = 'internal scratch']
  %s0 = inlined_call_operand.hbm [shape: bf16[32,128], index: 0, kind: input, shape index: {}]
  %s1 = inlined_call_operand.hbm [shape: bf16[128,512], index: 1, kind: input, shape index: {}]
  %s2 = inlined_call_operand.hbm [shape: f32[1,512], index: 2, kind: input, shape index: {}]
  %s3 = inlined_call_operand.hbm [shape: f32[32,512], index: 3, kind: input, shape index: {}]
  %s4 = inlined_call_operand.hbm [shape: f32[32,512], index: 4, kind: output, shape index: {}]
  %s5 = sld [smem:[#allocation0]]
  $region42: #{tpu_custom_call.1} parent=0
    _
  %s7 = ssub.s32 1, %s5
  %s8 = scalar_select 0, %s7, %s5
  $region1: #{tpu_custom_call.1} parent=0
    #allocation2 [shape = 'u8[8192]{0}', space=vmem, size = 0x2000, scoped, tag = 'input window, operand 0, single buffered']
    #allocation3 [shape = 's32[1]{0}', space=sflag, size = 0x4, scoped, tag = 'scoped memory for tpu_custom_call.1']
    #allocation4 [shape = 's32[1]{0}', space=sflag, size = 0x4, scoped, tag = 'scoped memory for tpu_custom_call.1']
    #allocation5 [shape = 'u8[131072]{0}', space=vmem, size = 0x20000, scoped, tag = 'input window, operand 1, single buffered']
    #allocation6 [shape = 's32[1]{0}', space=sflag, size = 0x4, scoped, tag = 'scoped memory for tpu_custom_call.1']
    #allocation7 [shape = 'u8[2048]{0}', space=vmem, size = 0x800, scoped, tag = 'input window, operand 2, single buffered']
    #allocation8 [shape = 'u8[65536]{0}', space=vmem, size = 0x10000, scoped, tag = 'input window, operand 3, single buffered']
    #allocation9 [shape = 's32[1]{0}', space=sflag, size = 0x4, scoped, tag = 'scoped memory for tpu_custom_call.1']
    #allocation10 [shape = 'u8[65536]{0}', space=vmem, size = 0x10000, scoped, tag = 'output window, operand 0, single buffered']
    %9 = vsyncpa [#allocation3], 0
    %10 = vsyncpa [#allocation6], 0
    %11 = vsyncpa [#allocation9], 0
    %12 = vsyncpa [#allocation4], 0
    // Predicated region
    $region2: #{tpu_custom_call.1} parent=1 // pred_check
      _
    $region3: #{tpu_custom_call.1} parent=1 // pred_check_branch
      %14 = sbr.rel (0) target = $region5
    $region4: #{tpu_custom_call.1} parent=1 // pred_region
      %s16 = ssub.s32 256, 256
      %17 = vsyncadd [#allocation3], %s16
      %s18 = sshll.u32 [#allocation2], 4
      %s19 = int_to_ptr.vmem [resolvable:$true] %s18
      %24 = dma.hbm_to_vmem [thread:$0]  %s0, 256, %s19, [#allocation3], 64, 64, 4
    $region5: #{tpu_custom_call.1} parent=1 // pred_fallthru
      _
    // Predicated region
    $region6: #{tpu_custom_call.1} parent=1 // pred_check
      _
    $region7: #{tpu_custom_call.1} parent=1 // pred_check_branch
      %26 = sbr.rel (0) target = $region9
    $region8: #{tpu_custom_call.1} parent=1 // pred_region
      %s28 = ssub.s32 4096, 4096
      %29 = vsyncadd [#allocation6], %s28
      %s30 = sshll.u32 [#allocation5], 4
      %s31 = int_to_ptr.vmem [resolvable:$true] %s30
      %36 = dma.hbm_to_vmem [thread:$0]  %s1, 4096, %s31, [#allocation6], 256, 256, 16
    $region9: #{tpu_custom_call.1} parent=1 // pred_fallthru
      _
    // Predicated region
    $region10: #{tpu_custom_call.1} parent=1 // pred_check
      _
    $region11: #{tpu_custom_call.1} parent=1 // pred_check_branch
      %38 = sbr.rel (0) target = $region13
    $region12: #{tpu_custom_call.1} parent=1 // pred_region
      %s40 = ssub.s32 64, 64
      %41 = vsyncadd [#allocation6], %s40
      %s43 = sshll.u32 [#allocation7], 4
      %s44 = int_to_ptr.vmem [resolvable:$true] %s43
      %46 = dma.hbm_to_vmem [thread:$0]  %s2, 64, %s44, [#allocation6]
    $region13: #{tpu_custom_call.1} parent=1 // pred_fallthru
      _
    // Predicated region
    $region14: #{tpu_custom_call.1} parent=1 // pred_check
      _
    $region15: #{tpu_custom_call.1} parent=1 // pred_check_branch
      %48 = sbr.rel (0) target = $region17
    $region16: #{tpu_custom_call.1} parent=1 // pred_region
      %s50 = ssub.s32 2048, 2048
      %51 = vsyncadd [#allocation9], %s50
      %s52 = sshll.u32 [#allocation8], 4
      %s53 = int_to_ptr.vmem [resolvable:$true] %s52
      %58 = dma.hbm_to_vmem [thread:$0]  %s3, 2048, %s53, [#allocation9], 512, 512, 32
    $region17: #{tpu_custom_call.1} parent=1 // pred_fallthru
      _
    // Predicated region
    $region18: #{tpu_custom_call.1} parent=1 // pred_check
      _
    $region19: #{tpu_custom_call.1} parent=1 // pred_check_branch
      %60 = sbr.rel (0) target = $region21
    $region20: #{tpu_custom_call.1} parent=1 // pred_region
      %61 = dma.done [#allocation3], 256
    $region21: #{tpu_custom_call.1} parent=1 // pred_fallthru
      _
    // Predicated region
    $region22: #{tpu_custom_call.1} parent=1 // pred_check
      _
    $region23: #{tpu_custom_call.1} parent=1 // pred_check_branch
      %63 = sbr.rel (0) target = $region25
    $region24: #{tpu_custom_call.1} parent=1 // pred_region
      %64 = dma.done [#allocation6], 4096
    $region25: #{tpu_custom_call.1} parent=1 // pred_fallthru
      _
    // Predicated region
    $region26: #{tpu_custom_call.1} parent=1 // pred_check
      _
    $region27: #{tpu_custom_call.1} parent=1 // pred_check_branch
      %66 = sbr.rel (0) target = $region29
    $region28: #{tpu_custom_call.1} parent=1 // pred_region
      %67 = dma.done [#allocation6], 64
    $region29: #{tpu_custom_call.1} parent=1 // pred_fallthru
      _
    // Predicated region
    $region30: #{tpu_custom_call.1} parent=1 // pred_check
      _
    $region31: #{tpu_custom_call.1} parent=1 // pred_check_branch
      %69 = sbr.rel (0) target = $region33
    $region32: #{tpu_custom_call.1} parent=1 // pred_region
      %70 = dma.done [#allocation9], 2048
    $region33: #{tpu_custom_call.1} parent=1 // pred_fallthru
      _
    %v72 = vld [vmem:[#allocation2] sm:$0xf]
    %v73 = vld [vmem:[#allocation2 + $0x4] sm:$0xf]
    %v74 = vld [vmem:[#allocation2 + $0x8] sm:$0xf]
    %v75 = vld [vmem:[#allocation2 + $0xc] sm:$0xf]
    %v76 = vld [vmem:[#allocation5] sm:$0xff]
    %v77 = vld [vmem:[#allocation5 + $0x8] sm:$0xff]
    %v78 = vld [vmem:[#allocation5 + $0x10] sm:$0xff]
    %v79 = vld [vmem:[#allocation5 + $0x18] sm:$0xff]
    %v80 = vld [vmem:[#allocation5 + $0x20] sm:$0xff]
    %v81 = vld [vmem:[#allocation5 + $0x28] sm:$0xff]
    %v82 = vld [vmem:[#allocation5 + $0x30] sm:$0xff]
    %v83 = vld [vmem:[#allocation5 + $0x38] sm:$0xff]
    %v84 = vld [vmem:[#allocation5 + $0x40] sm:$0xff]
    %v85 = vld [vmem:[#allocation5 + $0x48] sm:$0xff]
    %v86 = vld [vmem:[#allocation5 + $0x50] sm:$0xff]
    %v87 = vld [vmem:[#allocation5 + $0x58] sm:$0xff]
    %v88 = vld [vmem:[#allocation5 + $0x60] sm:$0xff]
    %v89 = vld [vmem:[#allocation5 + $0x68] sm:$0xff]
    %v90 = vld [vmem:[#allocation5 + $0x70] sm:$0xff]
    %v91 = vld [vmem:[#allocation5 + $0x78] sm:$0xff]
    %v92 = vld [vmem:[#allocation5 + $0x80] sm:$0xff]
    %v93 = vld [vmem:[#allocation5 + $0x88] sm:$0xff]
    %v94 = vld [vmem:[#allocation5 + $0x90] sm:$0xff]
    %v95 = vld [vmem:[#allocation5 + $0x98] sm:$0xff]
    %v96 = vld [vmem:[#allocation5 + $0xa0] sm:$0xff]
    %v97 = vld [vmem:[#allocation5 + $0xa8] sm:$0xff]
    %v98 = vld [vmem:[#allocation5 + $0xb0] sm:$0xff]
    %v99 = vld [vmem:[#allocation5 + $0xb8] sm:$0xff]
    %v100 = vld [vmem:[#allocation5 + $0xc0] sm:$0xff]
    %v101 = vld [vmem:[#allocation5 + $0xc8] sm:$0xff]
    %v102 = vld [vmem:[#allocation5 + $0xd0] sm:$0xff]
    %v103 = vld [vmem:[#allocation5 + $0xd8] sm:$0xff]
    %v104 = vld [vmem:[#allocation5 + $0xe0] sm:$0xff]
    %v105 = vld [vmem:[#allocation5 + $0xe8] sm:$0xff]
    %v106 = vld [vmem:[#allocation5 + $0xf0] sm:$0xff]
    %v107 = vld [vmem:[#allocation5 + $0xf8] sm:$0xff]
    %v108 = vld [vmem:[#allocation7] sm:$0xf]
    %v110 = vlaneseq
    %v111 = vshrl.u32 %v110, 7
    %v112 = vsub.s32 0, %v111
    %v113 = vrot.slane %v108, %v112
    %v114 = vlaneseq
    %v115 = vshrl.u32 %v114, 7
    %v116 = vsub.s32 1, %v115
    %v117 = vrot.slane %v108, %v116
    %v118 = vlaneseq
    %v119 = vshrl.u32 %v118, 7
    %v120 = vsub.s32 2, %v119
    %v121 = vrot.slane %v108, %v120
    %v122 = vlaneseq
    %v123 = vshrl.u32 %v122, 7
    %v124 = vsub.s32 3, %v123
    %v125 = vrot.slane %v108, %v124
    %v134 = vunpack.c.l.b16 %v72
    %v135 = vunpack.c.l.b16 %v73
    %v136 = vunpack.c.l.b16 %v74
    %v137 = vunpack.c.l.b16 %v75
    %v138 = vpack.c.b16 %v135, %v134
    %v139 = vpack.c.b16 %v137, %v136
    %v174 = vunpack.c.l.b16 %v76
    %v175 = vunpack.c.h.b16 %v76
    %v176 = vunpack.c.l.b16 %v77
    %v177 = vunpack.c.h.b16 %v77
    %v178 = vunpack.c.l.b16 %v78
    %v179 = vunpack.c.h.b16 %v78
    %v180 = vunpack.c.l.b16 %v79
    %v181 = vunpack.c.h.b16 %v79
    %v182 = vunpack.c.l.b16 %v80
    %v183 = vunpack.c.h.b16 %v80
    %v184 = vunpack.c.l.b16 %v81
    %v185 = vunpack.c.h.b16 %v81
    %v186 = vunpack.c.l.b16 %v82
    %v187 = vunpack.c.h.b16 %v82
    %v188 = vunpack.c.l.b16 %v83
    %v189 = vunpack.c.h.b16 %v83
    %v190 = vunpack.c.l.b16 %v84
    %v191 = vunpack.c.h.b16 %v84
    %v192 = vunpack.c.l.b16 %v85
    %v193 = vunpack.c.h.b16 %v85
    %v194 = vunpack.c.l.b16 %v86
    %v195 = vunpack.c.h.b16 %v86
    %v196 = vunpack.c.l.b16 %v87
    %v197 = vunpack.c.h.b16 %v87
    %v198 = vunpack.c.l.b16 %v88
    %v199 = vunpack.c.h.b16 %v88
    %v200 = vunpack.c.l.b16 %v89
    %v201 = vunpack.c.h.b16 %v89
    %v202 = vunpack.c.l.b16 %v90
    %v203 = vunpack.c.h.b16 %v90
    %v204 = vunpack.c.l.b16 %v91
    %v205 = vunpack.c.h.b16 %v91
    %v206 = vunpack.c.l.b16 %v92
    %v207 = vunpack.c.h.b16 %v92
    %v208 = vunpack.c.l.b16 %v93
    %v209 = vunpack.c.h.b16 %v93
    %v210 = vunpack.c.l.b16 %v94
    %v211 = vunpack.c.h.b16 %v94
    %v212 = vunpack.c.l.b16 %v95
    %v213 = vunpack.c.h.b16 %v95
    %v214 = vunpack.c.l.b16 %v96
    %v215 = vunpack.c.h.b16 %v96
    %v216 = vunpack.c.l.b16 %v97
    %v217 = vunpack.c.h.b16 %v97
    %v218 = vunpack.c.l.b16 %v98
    %v219 = vunpack.c.h.b16 %v98
    %v220 = vunpack.c.l.b16 %v99
    %v221 = vunpack.c.h.b16 %v99
    %v222 = vunpack.c.l.b16 %v100
    %v223 = vunpack.c.h.b16 %v100
    %v224 = vunpack.c.l.b16 %v101
    %v225 = vunpack.c.h.b16 %v101
    %v226 = vunpack.c.l.b16 %v102
    %v227 = vunpack.c.h.b16 %v102
    %v228 = vunpack.c.l.b16 %v103
    %v229 = vunpack.c.h.b16 %v103
    %v230 = vunpack.c.l.b16 %v104
    %v231 = vunpack.c.h.b16 %v104
    %v232 = vunpack.c.l.b16 %v105
    %v233 = vunpack.c.h.b16 %v105
    %v234 = vunpack.c.l.b16 %v106
    %v235 = vunpack.c.h.b16 %v106
    %v236 = vunpack.c.l.b16 %v107
    %v237 = vunpack.c.h.b16 %v107
    %v238 = vpack.c.b16 %v178, %v174
    %v239 = vpack.c.b16 %v179, %v175
    %v240 = vpack.c.b16 %v180, %v176
    %v241 = vpack.c.b16 %v181, %v177
    %v242 = vpack.c.b16 %v186, %v182
    %v243 = vpack.c.b16 %v187, %v183
    %v244 = vpack.c.b16 %v188, %v184
    %v245 = vpack.c.b16 %v189, %v185
    %v246 = vpack.c.b16 %v194, %v190
    %v247 = vpack.c.b16 %v195, %v191
    %v248 = vpack.c.b16 %v196, %v192
    %v249 = vpack.c.b16 %v197, %v193
    %v250 = vpack.c.b16 %v202, %v198
    %v251 = vpack.c.b16 %v203, %v199
    %v252 = vpack.c.b16 %v204, %v200
    %v253 = vpack.c.b16 %v205, %v201
    %v254 = vpack.c.b16 %v210, %v206
    %v255 = vpack.c.b16 %v211, %v207
    %v256 = vpack.c.b16 %v212, %v208
    %v257 = vpack.c.b16 %v213, %v209
    %v258 = vpack.c.b16 %v218, %v214
    %v259 = vpack.c.b16 %v219, %v215
    %v260 = vpack.c.b16 %v220, %v216
    %v261 = vpack.c.b16 %v221, %v217
    %v262 = vpack.c.b16 %v226, %v222
    %v263 = vpack.c.b16 %v227, %v223
    %v264 = vpack.c.b16 %v228, %v224
    %v265 = vpack.c.b16 %v229, %v225
    %v266 = vpack.c.b16 %v234, %v230
    %v267 = vpack.c.b16 %v235, %v231
    %v268 = vpack.c.b16 %v236, %v232
    %v269 = vpack.c.b16 %v237, %v233
    %302 = vmatprep.subr.bf16.mxu0 %v267
    %303 = vmatpush1.bf16.msra.mxu0 %v266
    %304 = vmatprep.subr.bf16.mxu0 %v263
    %305 = vmatpush1.bf16.msra.mxu0 %v262
    %306 = vmatprep.subr.bf16.mxu0 %v259
    %307 = vmatpush1.bf16.msra.mxu0 %v258
    %308 = vmatprep.subr.bf16.mxu0 %v255
    %309 = vmatpush1.bf16.msra.mxu0 %v254
    %310 = vmatprep.subr.bf16.mxu0 %v251
    %311 = vmatpush1.bf16.msra.mxu0 %v250
    %312 = vmatprep.subr.bf16.mxu0 %v247
    %313 = vmatpush1.bf16.msra.mxu0 %v246
    %314 = vmatprep.subr.bf16.mxu0 %v243
    %315 = vmatpush1.bf16.msra.mxu0 %v242
    %316 = vmatprep.subr.bf16.mxu0 %v239
    %317 = vmatpush1.bf16.msra.mxu0 %v238
    %318 = vmatprep.subr.bf16.mxu0 0
    %319 = vmatpush2.bf16.msra.mxu0 0
    %320 = vmatprep.subr.bf16.mxu0 0
    %321 = vmatpush2.bf16.msra.mxu0 0
    %322 = vmatprep.subr.bf16.mxu0 0
    %323 = vmatpush2.bf16.msra.mxu0 0
    %324 = vmatprep.subr.bf16.mxu0 0
    %325 = vmatpush2.bf16.msra.mxu0 0
    %326 = vmatprep.subr.bf16.mxu0 0
    %327 = vmatpush2.bf16.msra.mxu0 0
    %328 = vmatprep.subr.bf16.mxu0 0
    %329 = vmatpush2.bf16.msra.mxu0 0
    %330 = vmatprep.subr.bf16.mxu0 0
    %331 = vmatpush2.bf16.msra.mxu0 0
    %332 = vmatprep.subr.bf16.mxu0 0
    %333 = vmatpush2.bf16.msra.mxu0 0
    %334 = vmatprep.mubr.bf16.mxu0 0
    %335 = vmatmul.mubr.bf16.gmra.mxu0 %v138
    %v336 = vpop.f32.mrf.mxu0
    %v337 = vadd.f32 %v113, %v336
    %v338 = vpop.f32.mrf.mxu0
    %v339 = vadd.f32 %v117, %v338
    %v340 = vpop.f32.mrf.mxu0
    %v341 = vadd.f32 %v113, %v340
    %v342 = vpop.f32.mrf.mxu0
    %v343 = vadd.f32 %v117, %v342
    %344 = vmatprep.mubr.bf16.mxu0 0
    %345 = vmatmul.mubr.bf16.gmra.mxu0 %v139
    %v346 = vpop.f32.mrf.mxu0
    %v347 = vadd.f32 %v113, %v346
    %v348 = vpop.f32.mrf.mxu0
    %v349 = vadd.f32 %v117, %v348
    %v350 = vpop.f32.mrf.mxu0
    %v351 = vadd.f32 %v113, %v350
    %v352 = vpop.f32.mrf.mxu0
    %v353 = vadd.f32 %v117, %v352
    %354 = vdwg.mxu0
    %355 = vmatprep.subr.bf16.mxu0 %v269
    %356 = vmatpush1.bf16.msra.mxu0 %v268
    %357 = vmatprep.subr.bf16.mxu0 %v265
    %358 = vmatpush1.bf16.msra.mxu0 %v264
    %359 = vmatprep.subr.bf16.mxu0 %v261
    %360 = vmatpush1.bf16.msra.mxu0 %v260
    %361 = vmatprep.subr.bf16.mxu0 %v257
    %362 = vmatpush1.bf16.msra.mxu0 %v256
    %363 = vmatprep.subr.bf16.mxu0 %v253
    %364 = vmatpush1.bf16.msra.mxu0 %v252
    %365 = vmatprep.subr.bf16.mxu0 %v249
    %366 = vmatpush1.bf16.msra.mxu0 %v248
    %367 = vmatprep.subr.bf16.mxu0 %v245
    %368 = vmatpush1.bf16.msra.mxu0 %v244
    %369 = vmatprep.subr.bf16.mxu0 %v241
    %370 = vmatpush1.bf16.msra.mxu0 %v240
    %371 = vmatprep.subr.bf16.mxu0 0
    %372 = vmatpush2.bf16.msra.mxu0 0
    %373 = vmatprep.subr.bf16.mxu0 0
    %374 = vmatpush2.bf16.msra.mxu0 0
    %375 = vmatprep.subr.bf16.mxu0 0
    %376 = vmatpush2.bf16.msra.mxu0 0
    %377 = vmatprep.subr.bf16.mxu0 0
    %378 = vmatpush2.bf16.msra.mxu0 0
    %379 = vmatprep.subr.bf16.mxu0 0
    %380 = vmatpush2.bf16.msra.mxu0 0
    %381 = vmatprep.subr.bf16.mxu0 0
    %382 = vmatpush2.bf16.msra.mxu0 0
    %383 = vmatprep.subr.bf16.mxu0 0
    %384 = vmatpush2.bf16.msra.mxu0 0
    %385 = vmatprep.subr.bf16.mxu0 0
    %386 = vmatpush2.bf16.msra.mxu0 0
    %387 = vmatprep.mubr.bf16.mxu0 0
    %388 = vmatmul.mubr.bf16.gmra.mxu0 %v138
    %v389 = vpop.f32.mrf.mxu0
    %v390 = vadd.f32 %v121, %v389
    %v391 = vpop.f32.mrf.mxu0
    %v392 = vadd.f32 %v125, %v391
    %v393 = vpop.f32.mrf.mxu0
    %v394 = vadd.f32 %v121, %v393
    %v395 = vpop.f32.mrf.mxu0
    %v396 = vadd.f32 %v125, %v395
    %397 = vmatprep.mubr.bf16.mxu0 0
    %398 = vmatmul.mubr.bf16.gmra.mxu0 %v139
    %v399 = vpop.f32.mrf.mxu0
    %v400 = vadd.f32 %v121, %v399
    %v401 = vpop.f32.mrf.mxu0
    %v402 = vadd.f32 %v125, %v401
    %v403 = vpop.f32.mrf.mxu0
    %v404 = vadd.f32 %v121, %v403
    %v405 = vpop.f32.mrf.mxu0
    %v406 = vadd.f32 %v125, %v405
    %407 = vdwg.mxu0
    %v408 = vld [vmem:[#allocation8] sm:$0xff]
    %v409 = vld [vmem:[#allocation8 + $0x8] sm:$0xff]
    %v410 = vld [vmem:[#allocation8 + $0x10] sm:$0xff]
    %v411 = vld [vmem:[#allocation8 + $0x18] sm:$0xff]
    %v412 = vld [vmem:[#allocation8 + $0x20] sm:$0xff]
    %v413 = vld [vmem:[#allocation8 + $0x28] sm:$0xff]
    %v414 = vld [vmem:[#allocation8 + $0x30] sm:$0xff]
    %v415 = vld [vmem:[#allocation8 + $0x38] sm:$0xff]
    %v416 = vld [vmem:[#allocation8 + $0x40] sm:$0xff]
    %v417 = vld [vmem:[#allocation8 + $0x48] sm:$0xff]
    %v418 = vld [vmem:[#allocation8 + $0x50] sm:$0xff]
    %v419 = vld [vmem:[#allocation8 + $0x58] sm:$0xff]
    %v420 = vld [vmem:[#allocation8 + $0x60] sm:$0xff]
    %v421 = vld [vmem:[#allocation8 + $0x68] sm:$0xff]
    %v422 = vld [vmem:[#allocation8 + $0x70] sm:$0xff]
    %v423 = vld [vmem:[#allocation8 + $0x78] sm:$0xff]
    %v424 = vadd.f32 %v337, %v408
    %v425 = vadd.f32 %v339, %v409
    %v426 = vadd.f32 %v390, %v410
    %v427 = vadd.f32 %v392, %v411
    %v428 = vadd.f32 %v341, %v412
    %v429 = vadd.f32 %v343, %v413
    %v430 = vadd.f32 %v394, %v414
    %v431 = vadd.f32 %v396, %v415
    %v432 = vadd.f32 %v347, %v416
    %v433 = vadd.f32 %v349, %v417
    %v434 = vadd.f32 %v400, %v418
    %v435 = vadd.f32 %v402, %v419
    %v436 = vadd.f32 %v351, %v420
    %v437 = vadd.f32 %v353, %v421
    %v438 = vadd.f32 %v404, %v422
    %v439 = vadd.f32 %v406, %v423
    %440 = vst [vmem:[#allocation10] sm:$0xff] %v424
    %441 = vst [vmem:[#allocation10 + $0x8] sm:$0xff] %v425
    %442 = vst [vmem:[#allocation10 + $0x10] sm:$0xff] %v426
    %443 = vst [vmem:[#allocation10 + $0x18] sm:$0xff] %v427
    %444 = vst [vmem:[#allocation10 + $0x20] sm:$0xff] %v428
    %445 = vst [vmem:[#allocation10 + $0x28] sm:$0xff] %v429
    %446 = vst [vmem:[#allocation10 + $0x30] sm:$0xff] %v430
    %447 = vst [vmem:[#allocation10 + $0x38] sm:$0xff] %v431
    %448 = vst [vmem:[#allocation10 + $0x40] sm:$0xff] %v432
    %449 = vst [vmem:[#allocation10 + $0x48] sm:$0xff] %v433
    %450 = vst [vmem:[#allocation10 + $0x50] sm:$0xff] %v434
    %451 = vst [vmem:[#allocation10 + $0x58] sm:$0xff] %v435
    %452 = vst [vmem:[#allocation10 + $0x60] sm:$0xff] %v436
    %453 = vst [vmem:[#allocation10 + $0x68] sm:$0xff] %v437
    %454 = vst [vmem:[#allocation10 + $0x70] sm:$0xff] %v438
    %455 = vst [vmem:[#allocation10 + $0x78] sm:$0xff] %v439
    // Predicated region
    $region34: #{tpu_custom_call.1} parent=1 // pred_check
      _
    $region35: #{tpu_custom_call.1} parent=1 // pred_check_branch
      %457 = sbr.rel (0) target = $region37
    $region36: #{tpu_custom_call.1} parent=1 // pred_region
      %s459 = ssub.s32 2048, 2048
      %460 = vsyncadd [#allocation4], %s459
      %s461 = sshll.u32 [#allocation10], 4
      %s462 = int_to_ptr.vmem [resolvable:$true] %s461
      %467 = dma.vmem_to_hbm [thread:$0]  %s462, 2048, %s4, [#allocation4], 512, 512, 32
    $region37: #{tpu_custom_call.1} parent=1 // pred_fallthru
      _
    // Predicated region
    $region38: #{tpu_custom_call.1} parent=1 // pred_check
      _
    $region39: #{tpu_custom_call.1} parent=1 // pred_check_branch
      %469 = sbr.rel (0) target = $region41
    $region40: #{tpu_custom_call.1} parent=1 // pred_region
      %470 = dma.done [#allocation4], 2048
    $region41: #{tpu_custom_call.1} parent=1 // pred_fallthru
      _
    %471 = vsyncpa [#allocation3], 1
    %472 = vsyncpa [#allocation6], 1
    %473 = vsyncpa [#allocation9], 1
    %474 = vsyncpa [#allocation4], 1

</llo_original>
